<compile_context>
chip_gen: v7x
topology: tpu7x:2x2x1
jax: 0.10.0
libtpu: 0.0.40
codegen_flags: <defaults>
</compile_context>

<pallas_src>
import functools

import jax
import jax.numpy as jnp
from jax.experimental import pallas as pl
from jax.experimental.pallas import tpu as pltpu


def _disc_kernel(bias_ref, h_ref, w_ref, body_ref, halo_ref, out_ref, *,
                 n_rounds, tile_n):
    """One grid step = one tile of TN nodes, all (R+1) rounds fused.

    bias_ref : SMEM (1,)        -- bilinear bias (f32)
    h_ref    : VMEM (TN, H)     -- h_pl tile (storage dtype, f32 or bf16)
    w_ref    : VMEM (H, H)      -- bilinear weight W[0] (grid-invariant)
    body_ref : VMEM (TN, H)     -- this tile's rows of c (storage dtype)
    halo_ref : VMEM (Rh, H)     -- R preceding rows in mod-(N-1) shift space
    out_ref  : VMEM (R+1, TN)   -- lane-dense, round-major scores (f32)
    """
    # MXU matmul in the storage dtype (native bf16 path), f32 accumulation.
    t = jnp.dot(h_ref[...], w_ref[...],
                preferred_element_type=jnp.float32)            # (TN, H) f32
    body = body_ref[...]                                       # storage dtype

    # Round 0: context is the tile body itself (VPU multiply + XLU reduce;
    # H is far too small to bother the MXU).  bf16 ctx promotes to f32 here.
    rows = [jnp.sum(t * body, axis=-1)]                        # (TN,) f32

    if n_rounds > 0:
        halo = halo_ref[...]                                   # (R, H)
        for k in range(1, n_rounds + 1):
            # Round-k context: local rows j<k come from the halo, rows j>=k
            # are the body shifted down by k rows (pure sublane shift/select).
            ctx = jnp.concatenate(
                [halo[n_rounds - k:, :], body[: tile_n - k, :]], axis=0)
            rows.append(jnp.sum(t * ctx, axis=-1))

    # Single dense store; bias broadcast hoisted out of the round loop.
    out = jnp.stack(rows, axis=0) + bias_ref[0]                # (R+1, TN) f32
    out_ref[...] = out.astype(out_ref.dtype)


def _vmem_limit_bytes():
    """64 MiB on v5e/v6e (128 MiB physical); ~75% of physical on v7x."""
    try:
        phys = pltpu.get_tpu_info().vmem_capacity_bytes
    except Exception:  # pragma: no cover - conservative fallback
        phys = 128 * 1024 * 1024
    return int(min(64 * 1024 * 1024, phys * 3 // 4))


def _choose_tile_n(n, h, r, *, vmem_budget_bytes, min_tiles=4):
    """Node-tile size: divides n, keeps >= min_tiles grid steps (megacore on
    v7x + DMA pipelining everywhere), fits the VMEM budget, and prefers
    lane-dense tiles (multiples of 128) with an even number of grid steps."""
    if n < 8:
        return n
    itemsize = 4  # budget the f32 worst case
    per_row = itemsize * h * 5 + itemsize * 2 * (r + 1)   # h/body dbuf, T, out
    fixed = itemsize * 2 * (h * h + max(r, 1) * h)         # W + halo (dbuf)
    vmem_cap = max(8, (vmem_budget_bytes - fixed) // max(per_row, 1))
    cap = min(int(vmem_cap), max(n // max(min_tiles, 1), 8), n)
    for granule in (128, 8):
        best = None
        tn = (cap // granule) * granule
        while tn >= granule:
            if n % tn == 0:
                if best is None:
                    best = tn
                if (n // tn) % 2 == 0:   # even step count balances v7x's 2 TCs
                    return tn
            tn -= granule
        if best is not None:
            return best
    return n  # no 8-aligned divisor: single full-N tile (still correct)


def discriminator_forward(c, h_pl, weight, bias, negsamp_round, tile_n=None):
    """Mirrors Discriminator.forward(c, h_pl). Returns ((R+1)*N, 1) f32 logits."""
    n, h = c.shape
    r = int(negsamp_round)
    vmem_limit = _vmem_limit_bytes()
    tn = tile_n if tile_n is not None else _choose_tile_n(
        n, h, r, vmem_budget_bytes=(vmem_limit * 3) // 5)
    assert n % tn == 0, (n, tn)
    assert 0 <= r < tn, (r, tn)
    ntiles = n // tn

    # Keep the MXU on a single input dtype (bf16 inputs -> native bf16 MXU).
    weight = weight.astype(h_pl.dtype)
    bias = bias.astype(jnp.float32)

    # Tiny per-tile halo (the ONLY extra HBM array): row m of tile t is
    # c[(t*tn - r + m) mod (n-1)].  The torch shift applied k times gives
    # c_k[i] = c[(i - k) mod (n-1)], so a tile only needs its own rows (read
    # straight from `c`) plus these R preceding rows in shift space.
    rh = max(r, 1)
    if r > 0:
        g = jnp.arange(ntiles, dtype=jnp.int32)[:, None] * tn    # (ntiles, 1)
        m = jnp.arange(r, dtype=jnp.int32)[None, :]               # (1, R)
        halo = c[jnp.mod(g - r + m, n - 1)]                       # (ntiles, R, H)
    else:
        halo = jnp.zeros((ntiles, 1, h), c.dtype)                 # unused dummy

    kernel = pl.pallas_call(
        functools.partial(_disc_kernel, n_rounds=r, tile_n=tn),
        out_shape=jax.ShapeDtypeStruct((r + 1, n), jnp.float32),
        grid_spec=pltpu.PrefetchScalarGridSpec(
            num_scalar_prefetch=0,
            grid=(ntiles,),
            in_specs=[
                pl.BlockSpec(memory_space=pltpu.MemorySpace.SMEM),  # bias (1,)
                pl.BlockSpec((tn, h), lambda i: (i, 0)),            # h_pl tile
                # Grid-invariant W: constant index_map -> fetched once.
                pl.BlockSpec((h, h), lambda i: (0, 0)),             # W
                pl.BlockSpec((tn, h), lambda i: (i, 0)),            # c tile (body)
                pl.BlockSpec((None, rh, h), lambda i: (i, 0, 0)),   # halo[i]
            ],
            out_specs=pl.BlockSpec((r + 1, tn), lambda i: (0, i)),  # round-major
        ),
        compiler_params=pltpu.CompilerParams(
            dimension_semantics=("parallel",),   # independent tiles -> megacore
            vmem_limit_bytes=vmem_limit,
        ),
    )
    out = kernel(bias, h_pl, weight, c, halo)     # (R+1, N), round-major
    # torch.cat(scs, dim=0) order == round-major, node-minor: this reshape is
    # a zero-copy contiguous reshape (no transpose pass).
    return out.reshape((r + 1) * n, 1)


def _reference(c, h_pl, weight, bias, negsamp_round):
    """Pure-JAX transcription of the torch forward, for a runtime sanity check."""
    def bilinear(x1, x2):
        return jnp.sum((x1 @ weight) * x2, axis=-1, keepdims=True) + bias[0]

    scs = [bilinear(h_pl, c)]
    c_mi = c
    for _ in range(negsamp_round):
        c_mi = jnp.concatenate([c_mi[-2:-1, :], c_mi[:-1, :]], axis=0)
        scs.append(bilinear(h_pl, c_mi))
    return jnp.concatenate(scs, axis=0)


if __name__ == "__main__":
    key = jax.random.PRNGKey(0)
    n, h = 512, 64            # nodes, hidden dim (n_h): 4 lane-dense tiles
    negsamp_round = 2

    k_c, k_h, k_w, k_b = jax.random.split(key, 4)
    c = jax.random.normal(k_c, (n, h), dtype=jnp.float32)
    h_pl = jax.random.normal(k_h, (n, h), dtype=jnp.float32)

    # xavier_uniform-style init for the Bilinear weight (out_features=1).
    bound = (6.0 / (h * h + h)) ** 0.5
    weight = jax.random.uniform(k_w, (h, h), minval=-bound, maxval=bound,
                                dtype=jnp.float32)
    # Module inits bias to 0; use a nonzero value here to exercise the bias path.
    bias = 0.1 * jax.random.normal(k_b, (1,), dtype=jnp.float32)

    fwd = jax.jit(functools.partial(discriminator_forward,
                                    negsamp_round=negsamp_round))
    logits = fwd(c, h_pl, weight, bias)
    jax.block_until_ready(logits)

    ref = _reference(c, h_pl, weight, bias, negsamp_round)
    assert logits.shape == ((negsamp_round + 1) * n, 1), logits.shape
    assert jnp.allclose(logits, ref, atol=1e-3, rtol=1e-3), float(
        jnp.max(jnp.abs(logits - ref)))

    # bf16 HBM storage path (halves the dominant HBM streams); compared
    # against an f32 reference evaluated on the same bf16-rounded inputs.
    c_bf = c.astype(jnp.bfloat16)
    h_bf = h_pl.astype(jnp.bfloat16)
    w_bf = weight.astype(jnp.bfloat16)
    logits_bf = jax.jit(functools.partial(discriminator_forward,
                                          negsamp_round=negsamp_round))(
        c_bf, h_bf, w_bf, bias)
    jax.block_until_ready(logits_bf)
    ref_bf = _reference(c_bf.astype(jnp.float32), h_bf.astype(jnp.float32),
                        w_bf.astype(jnp.float32), bias, negsamp_round)
    assert jnp.allclose(logits_bf, ref_bf, atol=2e-2, rtol=2e-2), float(
        jnp.max(jnp.abs(logits_bf - ref_bf)))

    print("KERNEL_OK")
</pallas_src>

<mosaic_0001>
module attributes {stable_mosaic.version = 11 : i64} {
  func.func @_disc_kernel(%arg0: i32, %arg1: memref<1xf32, #tpu.memory_space<smem>>, %arg2: memref<128x64xf32, #tpu.memory_space<vmem>>, %arg3: memref<64x64xf32, #tpu.memory_space<vmem>>, %arg4: memref<128x64xf32, #tpu.memory_space<vmem>>, %arg5: memref<1x2x64xf32, #tpu.memory_space<vmem>>, %arg6: memref<3x128xf32, #tpu.memory_space<vmem>>) attributes {dimension_semantics = [#tpu.dimension_semantics<parallel>], iteration_bounds = array<i64: 4>, scalar_prefetch = 0 : i64, scratch_operands = 0 : i64, tpu.core_type = #tpu.core_type<tc>, window_params = [{transform_indices = @transform_0, window_bounds = array<i64: 1>}, {transform_indices = @transform_1, window_bounds = array<i64: 128, 64>}, {pipeline_mode = #tpu.pipeline_mode<synchronous>, transform_indices = @transform_2, window_bounds = array<i64: 64, 64>}, {transform_indices = @transform_3, window_bounds = array<i64: 128, 64>}, {transform_indices = @transform_4, window_bounds = array<i64: 1, 2, 64>}, {transform_indices = @transform_5, window_bounds = array<i64: 3, 128>}]} {
    %c0 = arith.constant 0 : index
    %c0_0 = arith.constant 0 : index
    %0 = vector.load %arg2[%c0, %c0_0] : memref<128x64xf32, #tpu.memory_space<vmem>>, vector<128x64xf32>
    %c0_1 = arith.constant 0 : index
    %c0_2 = arith.constant 0 : index
    %1 = vector.load %arg3[%c0_1, %c0_2] : memref<64x64xf32, #tpu.memory_space<vmem>>, vector<64x64xf32>
    %cst = arith.constant dense<0.000000e+00> : vector<128x64xf32>
    %2 = tpu.matmul %0, %1, %cst {dimension_numbers = #tpu.dot_dimension_numbers<[1], [0], [0], [1], [0, 0, 1, 1], [], []>} : vector<128x64xf32>, vector<64x64xf32>, vector<128x64xf32> -> vector<128x64xf32>
    %c0_3 = arith.constant 0 : index
    %c0_4 = arith.constant 0 : index
    %3 = vector.load %arg4[%c0_3, %c0_4] : memref<128x64xf32, #tpu.memory_space<vmem>>, vector<128x64xf32>
    %4 = arith.mulf %2, %3 : vector<128x64xf32>
    %cst_5 = arith.constant dense<0.000000e+00> : vector<128xf32>
    %5 = vector.multi_reduction <add>, %4, %cst_5 [1] : vector<128x64xf32> to vector<128xf32>
    %c0_6 = arith.constant 0 : index
    %c0_7 = arith.constant 0 : index
    %c0_8 = arith.constant 0 : index
    %6 = vector.load %arg5[%c0_6, %c0_7, %c0_8] : memref<1x2x64xf32, #tpu.memory_space<vmem>>, vector<1x2x64xf32>
    %7 = vector.shape_cast %6 : vector<1x2x64xf32> to vector<2x64xf32>
    %8 = vector.extract_strided_slice %7 {offsets = [1, 0], sizes = [1, 64], strides = [1, 1]} : vector<2x64xf32> to vector<1x64xf32>
    %9 = vector.extract_strided_slice %3 {offsets = [0, 0], sizes = [127, 64], strides = [1, 1]} : vector<128x64xf32> to vector<127x64xf32>
    %10 = tpu.concatenate %8, %9 in 0 : vector<1x64xf32>, vector<127x64xf32> -> vector<128x64xf32>
    %11 = arith.mulf %2, %10 : vector<128x64xf32>
    %cst_9 = arith.constant dense<0.000000e+00> : vector<128xf32>
    %12 = vector.multi_reduction <add>, %11, %cst_9 [1] : vector<128x64xf32> to vector<128xf32>
    %13 = vector.extract_strided_slice %3 {offsets = [0, 0], sizes = [126, 64], strides = [1, 1]} : vector<128x64xf32> to vector<126x64xf32>
    %14 = tpu.concatenate %7, %13 in 0 : vector<2x64xf32>, vector<126x64xf32> -> vector<128x64xf32>
    %15 = arith.mulf %2, %14 : vector<128x64xf32>
    %cst_10 = arith.constant dense<0.000000e+00> : vector<128xf32>
    %16 = vector.multi_reduction <add>, %15, %cst_10 [1] : vector<128x64xf32> to vector<128xf32>
    %17 = vector.shape_cast %5 : vector<128xf32> to vector<1x128xf32>
    %18 = vector.shape_cast %12 : vector<128xf32> to vector<1x128xf32>
    %19 = vector.shape_cast %16 : vector<128xf32> to vector<1x128xf32>
    %20 = tpu.concatenate %17, %18, %19 in 0 : vector<1x128xf32>, vector<1x128xf32>, vector<1x128xf32> -> vector<3x128xf32>
    %c0_11 = arith.constant 0 : index
    %21 = memref.load %arg1[%c0_11] : memref<1xf32, #tpu.memory_space<smem>>
    %22 = vector.broadcast %21 : f32 to vector<3x128xf32>
    %23 = arith.addf %20, %22 : vector<3x128xf32>
    %c0_12 = arith.constant 0 : index
    %c0_13 = arith.constant 0 : index
    %24 = vector.load %arg6[%c0_12, %c0_13] : memref<3x128xf32, #tpu.memory_space<vmem>>, vector<3x128xf32>
    tpu.vector_store %arg6[%c0_12, %c0_13], %23 {strides = array<i32>} : memref<3x128xf32, #tpu.memory_space<vmem>>, vector<3x128xf32>,
    return
  }
  func.func @transform_0(%arg0: i32) -> i32 {
    %c0_i32 = arith.constant 0 : i32
    %c0_i32_0 = arith.constant 0 : i32
    return %c0_i32 : i32
  }
  func.func @transform_1(%arg0: i32) -> (i32, i32) {
    %c0_i32 = arith.constant 0 : i32
    %c0_i32_0 = arith.constant 0 : i32
    return %arg0, %c0_i32 : i32, i32
  }
  func.func @transform_2(%arg0: i32) -> (i32, i32) {
    %c0_i32 = arith.constant 0 : i32
    %c0_i32_0 = arith.constant 0 : i32
    %c0_i32_1 = arith.constant 0 : i32
    return %c0_i32, %c0_i32_0 : i32, i32
  }
  func.func @transform_3(%arg0: i32) -> (i32, i32) {
    %c0_i32 = arith.constant 0 : i32
    %c0_i32_0 = arith.constant 0 : i32
    return %arg0, %c0_i32 : i32, i32
  }
  func.func @transform_4(%arg0: i32) -> (i32, i32, i32) {
    %c0_i32 = arith.constant 0 : i32
    %c0_i32_0 = arith.constant 0 : i32
    %c0_i32_1 = arith.constant 0 : i32
    return %arg0, %c0_i32, %c0_i32_0 : i32, i32, i32
  }
  func.func @transform_5(%arg0: i32) -> (i32, i32) {
    %c0_i32 = arith.constant 0 : i32
    %c0_i32_0 = arith.constant 0 : i32
    return %c0_i32, %arg0 : i32, i32
  }
}

</mosaic_0001>

<llo_original>
// kernel: discriminator_forward.1
$region0: #{discriminator_forward.1}
  #allocation0 [shape = 'u32[]', space=smem, size = 0x4, offset = 0x4, fixed_abs, tag = 'smem constant byte address 0x4 - core index']
  #allocation1 [shape = 'u32[144,128]{1,0:T(1,128)}', space=vmem, size = 0x12000, scoped, tag = 'internal scratch']
  #allocation2 [shape = 'f32[1]{0:T(128)S(6)}', space=smem, size = 0x200, scoped, tag = 'scoped memory for discriminator_forward.1']
  %s0 = inlined_call_operand.<no memory space> [shape: f32[1], index: 0, kind: input, shape index: {}]
  %s1 = inlined_call_operand.hbm [shape: f32[512,64], index: 1, kind: input, shape index: {}]
  %s2 = inlined_call_operand.hbm [shape: f32[64,64], index: 2, kind: input, shape index: {}]
  %s3 = inlined_call_operand.hbm [shape: f32[512,64], index: 3, kind: input, shape index: {}]
  %s4 = inlined_call_operand.hbm [shape: f32[4,2,64], index: 4, kind: input, shape index: {}]
  %s5 = inlined_call_operand.hbm [shape: f32[3,512], index: 5, kind: output, shape index: {}]
  %s6 = sld [smem:[#allocation0]]
  $region69: #{discriminator_forward.1} parent=0
    _
  %s8 = ssub.s32 1, %s6
  %s9 = scalar_select 0, %s8, %s6
  %10 = sst [smem:[#allocation2]] %s0
  $region1: #{discriminator_forward.1} parent=0
    #allocation3 [shape = 'u8[131072]{0}', space=vmem, size = 0x20000, scoped, tag = 'input window, operand 1']
    #allocation4 [shape = 's32[2]{0}', space=sflag, size = 0x8, scoped, tag = 'scoped memory for discriminator_forward.1']
    #allocation5 [shape = 's32[2]{0}', space=sflag, size = 0x8, scoped, tag = 'scoped memory for discriminator_forward.1']
    #allocation6 [shape = 'u8[32768]{0}', space=vmem, size = 0x8000, scoped, tag = 'input window, operand 2, single buffered']
    #allocation7 [shape = 's32[1]{0}', space=sflag, size = 0x4, scoped, tag = 'scoped memory for discriminator_forward.1']
    #allocation8 [shape = 'u8[131072]{0}', space=vmem, size = 0x20000, scoped, tag = 'input window, operand 3']
    #allocation9 [shape = 'u8[2048]{0}', space=vmem, size = 0x800, scoped, tag = 'input window, operand 4']
    #allocation10 [shape = 'u8[4096]{0}', space=vmem, size = 0x1000, scoped, tag = 'output window, operand 0']
    %11 = vsyncpa [#allocation4], 0
    %s12 = scalar_lea.sflag [#allocation4], 1
    %13 = vsyncpa %s12, 0
    %14 = vsyncpa [#allocation7], 0
    %15 = vsyncpa [#allocation5], 0
    %s16 = scalar_lea.sflag [#allocation5], 1
    %17 = vsyncpa %s16, 0
    loop: start=0, step=1, limit=6
    $region2: #{discriminator_forward.1} parent=1 // loop_pre_header
      _
    $region3: #{discriminator_forward.1} parent=1 // loop_header
      %s19 = sphi 0, %s23
      %p20 = scmp.ge.s32.totalorder %s19, 6
      %s27 = sphi 0, %s27
      %s29 = sphi 0, %s27
      %s30 = sphi 0, %s29
      %s44 = sphi 0, %s30
      %s50 = sphi 0, %s52
      %s53 = sphi 0, %s50
      %s54 = sphi 0, %s53
      %s70 = sphi 0, %s54
      %s74 = sphi 0, %s74
      %s76 = sphi 0, %s74
      %s77 = sphi 0, %s76
      %s91 = sphi 0, %s77
      %s97 = sphi 0, %s99
      %s100 = sphi 0, %s97
      %s101 = sphi 0, %s100
      %s117 = sphi 0, %s101
      %s123 = sphi 0, %s125
      %s126 = sphi 0, %s123
      %s127 = sphi 0, %s126
      %s143 = sphi 0, %s127
      %s149 = sphi 0, %s151
      %s152 = sphi 0, %s149
      %s153 = sphi 0, %s152
      %s169 = sphi 0, %s153
    $region4: #{discriminator_forward.1} parent=1 // loop_header_branch
      %22 = sbr.rel (%p20) target = $region8
    $region5: #{discriminator_forward.1} parent=1 // loop_body
      %s24 = ssub.s32 %s19, 1
      %s25 = ssub.s32 %s19, 2
      %s26 = sadd.s32 %s19, 1
      %s28 = sadd.s32 %s27, 1
      %p31 = scmp.eq.s32.totalorder %s19, 3
      %p32 = scmp.ne.s32.totalorder %s27, %s29
      %p33 = scmp.eq.s32.totalorder %s19, 0
      %p34 = por %p32, %p33
      %p35 = scmp.ne.s32.totalorder %s27, %s29
      %p36 = scmp.eq.s32.totalorder %s24, 3
      %p37 = por %p35, %p36
      %p38 = scmp.ne.s32.totalorder %s29, %s30
      %p39 = scmp.eq.s32.totalorder %s24, 0
      %p40 = por %p38, %p39
      %p41 = scmp.ne.s32.totalorder %s29, %s30
      %p42 = scmp.eq.s32.totalorder %s25, 3
      %p43 = por %p41, %p42
      %p45 = scmp.ne.s32.totalorder %s30, %s44
      %p46 = scmp.eq.s32.totalorder %s25, 0
      %p47 = por %p45, %p46
      %s48 = ssub.s32 %s19, %s26
      %p49 = scmp.eq.s32.totalorder %s48, 0
      %s51 = sadd.s32 %s50, 1
      %s52 = scalar_select %p49, %s50, %s51
      %p55 = pneg %p49
      %p56 = scmp.eq.s32.totalorder %s19, 3
      %p57 = por %p55, %p56
      %p58 = scmp.ne.s32.totalorder %s50, %s53
      %p59 = scmp.eq.s32.totalorder %s19, 0
      %p60 = por %p58, %p59
      %p61 = scmp.ne.s32.totalorder %s50, %s53
      %p62 = scmp.eq.s32.totalorder %s24, 3
      %p63 = por %p61, %p62
      %p64 = scmp.ne.s32.totalorder %s53, %s54
      %p65 = scmp.eq.s32.totalorder %s24, 0
      %p66 = por %p64, %p65
      %p67 = scmp.ne.s32.totalorder %s53, %s54
      %p68 = scmp.eq.s32.totalorder %s25, 3
      %p69 = por %p67, %p68
      %p71 = scmp.ne.s32.totalorder %s54, %s70
      %p72 = scmp.eq.s32.totalorder %s25, 0
      %p73 = por %p71, %p72
      %s75 = sadd.s32 %s74, 1
      %p78 = scmp.eq.s32.totalorder %s19, 3
      %p79 = scmp.ne.s32.totalorder %s74, %s76
      %p80 = scmp.eq.s32.totalorder %s19, 0
      %p81 = por %p79, %p80
      %p82 = scmp.ne.s32.totalorder %s74, %s76
      %p83 = scmp.eq.s32.totalorder %s24, 3
      %p84 = por %p82, %p83
      %p85 = scmp.ne.s32.totalorder %s76, %s77
      %p86 = scmp.eq.s32.totalorder %s24, 0
      %p87 = por %p85, %p86
      %p88 = scmp.ne.s32.totalorder %s76, %s77
      %p89 = scmp.eq.s32.totalorder %s25, 3
      %p90 = por %p88, %p89
      %p92 = scmp.ne.s32.totalorder %s77, %s91
      %p93 = scmp.eq.s32.totalorder %s25, 0
      %p94 = por %p92, %p93
      %s95 = ssub.s32 %s19, %s26
      %p96 = scmp.eq.s32.totalorder %s95, 0
      %s98 = sadd.s32 %s97, 1
      %s99 = scalar_select %p96, %s97, %s98
      %p102 = pneg %p96
      %p103 = scmp.eq.s32.totalorder %s19, 3
      %p104 = por %p102, %p103
      %p105 = scmp.ne.s32.totalorder %s97, %s100
      %p106 = scmp.eq.s32.totalorder %s19, 0
      %p107 = por %p105, %p106
      %p108 = scmp.ne.s32.totalorder %s97, %s100
      %p109 = scmp.eq.s32.totalorder %s24, 3
      %p110 = por %p108, %p109
      %p111 = scmp.ne.s32.totalorder %s100, %s101
      %p112 = scmp.eq.s32.totalorder %s24, 0
      %p113 = por %p111, %p112
      %p114 = scmp.ne.s32.totalorder %s100, %s101
      %p115 = scmp.eq.s32.totalorder %s25, 3
      %p116 = por %p114, %p115
      %p118 = scmp.ne.s32.totalorder %s101, %s117
      %p119 = scmp.eq.s32.totalorder %s25, 0
      %p120 = por %p118, %p119
      %s121 = ssub.s32 %s19, %s26
      %p122 = scmp.eq.s32.totalorder %s121, 0
      %s124 = sadd.s32 %s123, 1
      %s125 = scalar_select %p122, %s123, %s124
      %p128 = pneg %p122
      %p129 = scmp.eq.s32.totalorder %s19, 3
      %p130 = por %p128, %p129
      %p131 = scmp.ne.s32.totalorder %s123, %s126
      %p132 = scmp.eq.s32.totalorder %s19, 0
      %p133 = por %p131, %p132
      %p134 = scmp.ne.s32.totalorder %s123, %s126
      %p135 = scmp.eq.s32.totalorder %s24, 3
      %p136 = por %p134, %p135
      %p137 = scmp.ne.s32.totalorder %s126, %s127
      %p138 = scmp.eq.s32.totalorder %s24, 0
      %p139 = por %p137, %p138
      %p140 = scmp.ne.s32.totalorder %s126, %s127
      %p141 = scmp.eq.s32.totalorder %s25, 3
      %p142 = por %p140, %p141
      %p144 = scmp.ne.s32.totalorder %s127, %s143
      %p145 = scmp.eq.s32.totalorder %s25, 0
      %p146 = por %p144, %p145
      %s147 = ssub.s32 %s19, %s26
      %p148 = scmp.eq.s32.totalorder %s147, 0
      %s150 = sadd.s32 %s149, 1
      %s151 = scalar_select %p148, %s149, %s150
      %p154 = pneg %p148
      %p155 = scmp.eq.s32.totalorder %s19, 3
      %p156 = por %p154, %p155
      %p157 = scmp.ne.s32.totalorder %s149, %s152
      %p158 = scmp.eq.s32.totalorder %s19, 0
      %p159 = por %p157, %p158
      %p160 = scmp.ne.s32.totalorder %s149, %s152
      %p161 = scmp.eq.s32.totalorder %s24, 3
      %p162 = por %p160, %p161
      %p163 = scmp.ne.s32.totalorder %s152, %s153
      %p164 = scmp.eq.s32.totalorder %s24, 0
      %p165 = por %p163, %p164
      %p166 = scmp.ne.s32.totalorder %s152, %s153
      %p167 = scmp.eq.s32.totalorder %s25, 3
      %p168 = por %p166, %p167
      %p170 = scmp.ne.s32.totalorder %s153, %s169
      %p171 = scmp.eq.s32.totalorder %s25, 0
      %p172 = por %p170, %p171
      %p173 = scmp.le.s32.totalorder 1, %s19
      %p174 = scmp.lt.s32.totalorder %s19, 5
      %p175 = pnand %p173, %p174
      %p176 = pneg %p175
      // Predicated region
      $region9: #{discriminator_forward.1} parent=5 // pred_check
        _
      $region10: #{discriminator_forward.1} parent=5 // pred_check_branch
        %178 = sbr.rel (%p175) target = $region12
      $region11: #{discriminator_forward.1} parent=5 // pred_region
        %s179 = ssub.s32 %s19, 1
        // Predicated region
        $region13: #{discriminator_forward.1} parent=11 // pred_check
          %p180 = pneg %p40
        $region14: #{discriminator_forward.1} parent=11 // pred_check_branch
          %182 = sbr.rel (%p180) target = $region16
        $region15: #{discriminator_forward.1} parent=11 // pred_region
          _
        $region16: #{discriminator_forward.1} parent=11 // pred_fallthru
          _
        // Predicated region
        $region17: #{discriminator_forward.1} parent=11 // pred_check
          %p183 = pneg %p87
        $region18: #{discriminator_forward.1} parent=11 // pred_check_branch
          %185 = sbr.rel (%p183) target = $region20
        $region19: #{discriminator_forward.1} parent=11 // pred_region
          %s187 = ssub.s32 1024, 1024
          %188 = vsyncadd [#allocation7], %s187
          %s189 = sshll.u32 [#allocation6], 4
          %s190 = int_to_ptr.vmem [resolvable:$true] %s189
          %195 = dma.hbm_to_vmem [thread:$0]  %s2, 1024, %s190, [#allocation7], 128, 128, 8
        $region20: #{discriminator_forward.1} parent=11 // pred_fallthru
          _
      $region12: #{discriminator_forward.1} parent=5 // pred_fallthru
        _
      %p196 = scmp.lt.s32.totalorder %s19, 4
      // Predicated region
      $region21: #{discriminator_forward.1} parent=5 // pred_check
        %p197 = pneg %p196
      $region22: #{discriminator_forward.1} parent=5 // pred_check_branch
        %199 = sbr.rel (%p197) target = $region24
      $region23: #{discriminator_forward.1} parent=5 // pred_region
        // Predicated region
        $region25: #{discriminator_forward.1} parent=23 // pred_check
          %p200 = pneg %p60
        $region26: #{discriminator_forward.1} parent=23 // pred_check_branch
          %202 = sbr.rel (%p200) target = $region28
        $region27: #{discriminator_forward.1} parent=23 // pred_region
          %s203 = sand.u32 %s19, 1
          %s204 = scalar_lea.sflag [#allocation4], %s203
          %s205 = sand.u32 %s50, 1
          %s206 = smul.addr %s205, 128
          %s207 = scalar_lea.vmem [#allocation3], %s206
          %s208 = smul.u32 16, %s19
          %s210 = ssub.s32 2048, 2048
          %211 = vsyncadd %s204, %s210
          %s212 = smul.addr %s208, 128
          %s213 = scalar_lea.hbm %s1, %s212
          %s214 = sshll.u32 %s207, 4
          %s215 = int_to_ptr.vmem [resolvable:$true] %s214
          %220 = dma.hbm_to_vmem [thread:$0]  %s213, 2048, %s215, %s204, 128, 128, 8
        $region28: #{discriminator_forward.1} parent=23 // pred_fallthru
          _
        // Predicated region
        $region29: #{discriminator_forward.1} parent=23 // pred_check
          %p221 = pneg %p107
        $region30: #{discriminator_forward.1} parent=23 // pred_check_branch
          %223 = sbr.rel (%p221) target = $region32
        $region31: #{discriminator_forward.1} parent=23 // pred_region
          %s224 = sand.u32 %s19, 1
          %s225 = scalar_lea.sflag [#allocation4], %s224
          %s226 = sand.u32 %s97, 1
          %s227 = smul.addr %s226, 128
          %s228 = scalar_lea.vmem [#allocation8], %s227
          %s229 = smul.u32 16, %s19
          %s231 = ssub.s32 2048, 2048
          %232 = vsyncadd %s225, %s231
          %s233 = smul.addr %s229, 128
          %s234 = scalar_lea.hbm %s3, %s233
          %s235 = sshll.u32 %s228, 4
          %s236 = int_to_ptr.vmem [resolvable:$true] %s235
          %241 = dma.hbm_to_vmem [thread:$0]  %s234, 2048, %s236, %s225, 128, 128, 8
        $region32: #{discriminator_forward.1} parent=23 // pred_fallthru
          _
        // Predicated region
        $region33: #{discriminator_forward.1} parent=23 // pred_check
          %p242 = pneg %p133
        $region34: #{discriminator_forward.1} parent=23 // pred_check_branch
          %244 = sbr.rel (%p242) target = $region36
        $region35: #{discriminator_forward.1} parent=23 // pred_region
          %s245 = sand.u32 %s19, 1
          %s246 = scalar_lea.sflag [#allocation4], %s245
          %s247 = sand.u32 %s123, 1
          %s248 = smul.addr %s247, 2
          %s249 = scalar_lea.vmem [#allocation9], %s248
          %s251 = ssub.s32 32, 32
          %252 = vsyncadd %s246, %s251
          %s253 = smul.addr %s19, 32
          %s254 = scalar_lea.hbm %s4, %s253
          %s256 = sshll.u32 %s249, 4
          %s257 = int_to_ptr.vmem [resolvable:$true] %s256
          %259 = dma.hbm_to_vmem [thread:$0]  %s254, 32, %s257, %s246
        $region36: #{discriminator_forward.1} parent=23 // pred_fallthru
          _
      $region24: #{discriminator_forward.1} parent=5 // pred_fallthru
        _
      %p260 = scmp.le.s32.totalorder 1, %s19
      %p261 = scmp.lt.s32.totalorder %s19, 5
      %p262 = pnand %p260, %p261
      %p263 = pneg %p262
      // Predicated region
      $region37: #{discriminator_forward.1} parent=5 // pred_check
        _
      $region38: #{discriminator_forward.1} parent=5 // pred_check_branch
        %265 = sbr.rel (%p262) target = $region40
      $region39: #{discriminator_forward.1} parent=5 // pred_region
        %s266 = ssub.s32 %s19, 1
        %s267 = sand.u32 %s24, 1
        %s268 = scalar_lea.sflag [#allocation4], %s267
        %s269 = sand.u32 %s53, 1
        %s270 = smul.addr %s269, 128
        %s271 = scalar_lea.vmem [#allocation3], %s270
        // Predicated region
        $region41: #{discriminator_forward.1} parent=39 // pred_check
          %p272 = pneg %p66
        $region42: #{discriminator_forward.1} parent=39 // pred_check_branch
          %274 = sbr.rel (%p272) target = $region44
        $region43: #{discriminator_forward.1} parent=39 // pred_region
          %275 = dma.done %s268, 2048
        $region44: #{discriminator_forward.1} parent=39 // pred_fallthru
          _
        // Predicated region
        $region45: #{discriminator_forward.1} parent=39 // pred_check
          %p276 = pneg %p87
        $region46: #{discriminator_forward.1} parent=39 // pred_check_branch
          %278 = sbr.rel (%p276) target = $region48
        $region47: #{discriminator_forward.1} parent=39 // pred_region
          %279 = dma.done [#allocation7], 1024
        $region48: #{discriminator_forward.1} parent=39 // pred_fallthru
          _
        %s280 = sand.u32 %s24, 1
        %s281 = scalar_lea.sflag [#allocation4], %s280
        %s282 = sand.u32 %s100, 1
        %s283 = smul.addr %s282, 128
        %s284 = scalar_lea.vmem [#allocation8], %s283
        // Predicated region
        $region49: #{discriminator_forward.1} parent=39 // pred_check
          %p285 = pneg %p113
        $region50: #{discriminator_forward.1} parent=39 // pred_check_branch
          %287 = sbr.rel (%p285) target = $region52
        $region51: #{discriminator_forward.1} parent=39 // pred_region
          %288 = dma.done %s281, 2048
        $region52: #{discriminator_forward.1} parent=39 // pred_fallthru
          _
        %s289 = sand.u32 %s24, 1
        %s290 = scalar_lea.sflag [#allocation4], %s289
        %s291 = sand.u32 %s126, 1
        %s292 = smul.addr %s291, 2
        %s293 = scalar_lea.vmem [#allocation9], %s292
        // Predicated region
        $region53: #{discriminator_forward.1} parent=39 // pred_check
          %p294 = pneg %p139
        $region54: #{discriminator_forward.1} parent=39 // pred_check_branch
          %296 = sbr.rel (%p294) target = $region56
        $region55: #{discriminator_forward.1} parent=39 // pred_region
          %297 = dma.done %s290, 32
        $region56: #{discriminator_forward.1} parent=39 // pred_fallthru
          _
        %p298 = pneg %p40
        %p299 = pneg %p37
        %s300 = sand.u32 %s24, 1
        %s301 = scalar_lea.sflag [#allocation4], %s300
        %s302 = sand.u32 %s53, 1
        %s303 = smul.addr %s302, 128
        %s304 = scalar_lea.vmem [#allocation3], %s303
        %p305 = pneg %p66
        %p306 = pneg %p63
        %p307 = pneg %p87
        %p308 = pneg %p84
        %s309 = sand.u32 %s24, 1
        %s310 = scalar_lea.sflag [#allocation4], %s309
        %s311 = sand.u32 %s100, 1
        %s312 = smul.addr %s311, 128
        %s313 = scalar_lea.vmem [#allocation8], %s312
        %p314 = pneg %p113
        %p315 = pneg %p110
        %s316 = sand.u32 %s24, 1
        %s317 = scalar_lea.sflag [#allocation4], %s316
        %s318 = sand.u32 %s126, 1
        %s319 = smul.addr %s318, 2
        %s320 = scalar_lea.vmem [#allocation9], %s319
        %p321 = pneg %p139
        %p322 = pneg %p136
        %p323 = pneg %p165
        %p324 = pneg %p162
        %s325 = sand.u32 %s152, 1
        %s326 = scalar_lea.sflag [#allocation5], %s325
        %s327 = sand.u32 %s152, 1
        %s328 = smul.addr %s327, 4
        %s329 = scalar_lea.vmem [#allocation10], %s328
        %s330 = smul.u32 16, %s24
        %s331 = smul.u32 16, %s24
        %v332 = vld [vmem:[%s271] sm:$0xff]
        %v333 = vld [vmem:[%s271 + $0x8] sm:$0xff]
        %v334 = vld [vmem:[%s271 + $0x10] sm:$0xff]
        %v335 = vld [vmem:[%s271 + $0x18] sm:$0xff]
        %v336 = vld [vmem:[%s271 + $0x20] sm:$0xff]
        %v337 = vld [vmem:[%s271 + $0x28] sm:$0xff]
        %v338 = vld [vmem:[%s271 + $0x30] sm:$0xff]
        %v339 = vld [vmem:[%s271 + $0x38] sm:$0xff]
        %v340 = vld [vmem:[%s271 + $0x40] sm:$0xff]
        %v341 = vld [vmem:[%s271 + $0x48] sm:$0xff]
        %v342 = vld [vmem:[%s271 + $0x50] sm:$0xff]
        %v343 = vld [vmem:[%s271 + $0x58] sm:$0xff]
        %v344 = vld [vmem:[%s271 + $0x60] sm:$0xff]
        %v345 = vld [vmem:[%s271 + $0x68] sm:$0xff]
        %v346 = vld [vmem:[%s271 + $0x70] sm:$0xff]
        %v347 = vld [vmem:[%s271 + $0x78] sm:$0xff]
        %v348 = vld [vmem:[#allocation6] sm:$0xff]
        %v349 = vld [vmem:[#allocation6 + $0x8] sm:$0xff]
        %v350 = vld [vmem:[#allocation6 + $0x10] sm:$0xff]
        %v351 = vld [vmem:[#allocation6 + $0x18] sm:$0xff]
        %v352 = vld [vmem:[#allocation6 + $0x20] sm:$0xff]
        %v353 = vld [vmem:[#allocation6 + $0x28] sm:$0xff]
        %v354 = vld [vmem:[#allocation6 + $0x30] sm:$0xff]
        %v355 = vld [vmem:[#allocation6 + $0x38] sm:$0xff]
        %vm356 = vcmask 523264
        %v358 = vsel %vm356, %v332, 0
        %v361 = vsel %vm356, %v333, 0
        %v364 = vsel %vm356, %v334, 0
        %v367 = vsel %vm356, %v335, 0
        %v370 = vsel %vm356, %v336, 0
        %v373 = vsel %vm356, %v337, 0
        %v376 = vsel %vm356, %v338, 0
        %v379 = vsel %vm356, %v339, 0
        %v382 = vsel %vm356, %v340, 0
        %v385 = vsel %vm356, %v341, 0
        %v388 = vsel %vm356, %v342, 0
        %v391 = vsel %vm356, %v343, 0
        %v394 = vsel %vm356, %v344, 0
        %v397 = vsel %vm356, %v345, 0
        %v400 = vsel %vm356, %v346, 0
        %v403 = vsel %vm356, %v347, 0
        %405 = vmatprep.subr.mxu0 0.0
        %406 = vmatpush1.msra.mxu0 %v348
        %407 = vmatprep.subr.mxu0 0.0
        %408 = vmatpush1.msra.mxu0 %v349
        %409 = vmatprep.subr.mxu0 0.0
        %410 = vmatpush1.msra.mxu0 %v350
        %411 = vmatprep.subr.mxu0 0.0
        %412 = vmatpush1.msra.mxu0 %v351
        %413 = vmatprep.subr.mxu0 0.0
        %414 = vmatpush1.msra.mxu0 %v352
        %415 = vmatprep.subr.mxu0 0.0
        %416 = vmatpush1.msra.mxu0 %v353
        %417 = vmatprep.subr.mxu0 0.0
        %418 = vmatpush1.msra.mxu0 %v354
        %419 = vmatprep.subr.mxu0 0.0
        %420 = vmatpush1.msra.mxu0 %v355
        %421 = vmatprep.subr.mxu0 0.0
        %422 = vmatpush1.msra.mxu0 0.0
        %423 = vmatprep.subr.mxu0 0.0
        %424 = vmatpush1.msra.mxu0 0.0
        %425 = vmatprep.subr.mxu0 0.0
        %426 = vmatpush1.msra.mxu0 0.0
        %427 = vmatprep.subr.mxu0 0.0
        %428 = vmatpush1.msra.mxu0 0.0
        %429 = vmatprep.subr.mxu0 0.0
        %430 = vmatpush1.msra.mxu0 0.0
        %431 = vmatprep.subr.mxu0 0.0
        %432 = vmatpush1.msra.mxu0 0.0
        %433 = vmatprep.subr.mxu0 0.0
        %434 = vmatpush1.msra.mxu0 0.0
        %435 = vmatprep.subr.mxu0 0.0
        %436 = vmatpush1.msra.mxu0 0.0
        %437 = vmatprep.subr.mxu0 0.0
        %438 = vmatpush1.msra.mxu0 0.0
        %439 = vmatprep.subr.mxu0 0.0
        %440 = vmatpush1.msra.mxu0 0.0
        %441 = vmatprep.subr.mxu0 0.0
        %442 = vmatpush1.msra.mxu0 0.0
        %443 = vmatprep.subr.mxu0 0.0
        %444 = vmatpush1.msra.mxu0 0.0
        %445 = vmatprep.subr.mxu0 0.0
        %446 = vmatpush1.msra.mxu0 0.0
        %447 = vmatprep.subr.mxu0 0.0
        %448 = vmatpush1.msra.mxu0 0.0
        %449 = vmatprep.subr.mxu0 0.0
        %450 = vmatpush1.msra.mxu0 0.0
        %451 = vmatprep.subr.mxu0 0.0
        %452 = vmatpush1.msra.mxu0 0.0
        %453 = vmatprep.subr.mxu0 0.0
        %454 = vmatpush1.msra.mxu0 0.0
        %455 = vmatprep.subr.mxu0 0.0
        %456 = vmatpush1.msra.mxu0 0.0
        %457 = vmatprep.subr.mxu0 0.0
        %458 = vmatpush1.msra.mxu0 0.0
        %459 = vmatprep.subr.mxu0 0.0
        %460 = vmatpush1.msra.mxu0 0.0
        %461 = vmatprep.subr.mxu0 0.0
        %462 = vmatpush1.msra.mxu0 0.0
        %463 = vmatprep.subr.mxu0 0.0
        %464 = vmatpush1.msra.mxu0 0.0
        %465 = vmatprep.subr.mxu0 0.0
        %466 = vmatpush1.msra.mxu0 0.0
        %467 = vmatprep.subr.mxu0 0.0
        %468 = vmatpush1.msra.mxu0 0.0
        %469 = vmatprep.mubr.f32.mxu0 0.0
        %470 = vmatmul.mubr.f32.gmra.mrb[0].mxu0 %v358
        %v471 = vpop.f32.mrb[0].mxu0
        %v472 = vadd.f32 0.0, %v471
        %v473 = vpop.f32.mrb[0].mxu0
        %474 = vmatprep.mubr.f32.mxu0 0.0
        %475 = vmatmul.mubr.f32.gmra.mrb[0].mxu0 %v361
        %v476 = vpop.f32.mrb[0].mxu0
        %v477 = vadd.f32 0.0, %v476
        %v478 = vpop.f32.mrb[0].mxu0
        %479 = vmatprep.mubr.f32.mxu0 0.0
        %480 = vmatmul.mubr.f32.gmra.mrb[0].mxu0 %v364
        %v481 = vpop.f32.mrb[0].mxu0
        %v482 = vadd.f32 0.0, %v481
        %v483 = vpop.f32.mrb[0].mxu0
        %484 = vmatprep.mubr.f32.mxu0 0.0
        %485 = vmatmul.mubr.f32.gmra.mrb[0].mxu0 %v367
        %v486 = vpop.f32.mrb[0].mxu0
        %v487 = vadd.f32 0.0, %v486
        %v488 = vpop.f32.mrb[0].mxu0
        %489 = vmatprep.mubr.f32.mxu0 0.0
        %490 = vmatmul.mubr.f32.gmra.mrb[0].mxu0 %v370
        %v491 = vpop.f32.mrb[0].mxu0
        %v492 = vadd.f32 0.0, %v491
        %v493 = vpop.f32.mrb[0].mxu0
        %494 = vmatprep.mubr.f32.mxu0 0.0
        %495 = vmatmul.mubr.f32.gmra.mrb[0].mxu0 %v373
        %v496 = vpop.f32.mrb[0].mxu0
        %v497 = vadd.f32 0.0, %v496
        %v498 = vpop.f32.mrb[0].mxu0
        %499 = vmatprep.mubr.f32.mxu0 0.0
        %500 = vmatmul.mubr.f32.gmra.mrb[0].mxu0 %v376
        %v501 = vpop.f32.mrb[0].mxu0
        %v502 = vadd.f32 0.0, %v501
        %v503 = vpop.f32.mrb[0].mxu0
        %504 = vmatprep.mubr.f32.mxu0 0.0
        %505 = vmatmul.mubr.f32.gmra.mrb[0].mxu0 %v379
        %v506 = vpop.f32.mrb[0].mxu0
        %v507 = vadd.f32 0.0, %v506
        %v508 = vpop.f32.mrb[0].mxu0
        %509 = vmatprep.mubr.f32.mxu0 0.0
        %510 = vmatmul.mubr.f32.gmra.mrb[0].mxu0 %v382
        %v511 = vpop.f32.mrb[0].mxu0
        %v512 = vadd.f32 0.0, %v511
        %v513 = vpop.f32.mrb[0].mxu0
        %514 = vmatprep.mubr.f32.mxu0 0.0
        %515 = vmatmul.mubr.f32.gmra.mrb[0].mxu0 %v385
        %v516 = vpop.f32.mrb[0].mxu0
        %v517 = vadd.f32 0.0, %v516
        %v518 = vpop.f32.mrb[0].mxu0
        %519 = vmatprep.mubr.f32.mxu0 0.0
        %520 = vmatmul.mubr.f32.gmra.mrb[0].mxu0 %v388
        %v521 = vpop.f32.mrb[0].mxu0
        %v522 = vadd.f32 0.0, %v521
        %v523 = vpop.f32.mrb[0].mxu0
        %524 = vmatprep.mubr.f32.mxu0 0.0
        %525 = vmatmul.mubr.f32.gmra.mrb[0].mxu0 %v391
        %v526 = vpop.f32.mrb[0].mxu0
        %v527 = vadd.f32 0.0, %v526
        %v528 = vpop.f32.mrb[0].mxu0
        %529 = vmatprep.mubr.f32.mxu0 0.0
        %530 = vmatmul.mubr.f32.gmra.mrb[0].mxu0 %v394
        %v531 = vpop.f32.mrb[0].mxu0
        %v532 = vadd.f32 0.0, %v531
        %v533 = vpop.f32.mrb[0].mxu0
        %534 = vmatprep.mubr.f32.mxu0 0.0
        %535 = vmatmul.mubr.f32.gmra.mrb[0].mxu0 %v397
        %v536 = vpop.f32.mrb[0].mxu0
        %v537 = vadd.f32 0.0, %v536
        %v538 = vpop.f32.mrb[0].mxu0
        %539 = vmatprep.mubr.f32.mxu0 0.0
        %540 = vmatmul.mubr.f32.gmra.mrb[0].mxu0 %v400
        %v541 = vpop.f32.mrb[0].mxu0
        %v542 = vadd.f32 0.0, %v541
        %v543 = vpop.f32.mrb[0].mxu0
        %544 = vmatprep.mubr.f32.mxu0 0.0
        %545 = vmatmul.mubr.f32.gmra.mrb[0].mxu0 %v403
        %v546 = vpop.f32.mrb[0].mxu0
        %v547 = vadd.f32 0.0, %v546
        %v548 = vpop.f32.mrb[0].mxu0
        %549 = vdwg.mxu0
        %v550 = vld [vmem:[%s284] sm:$0xff]
        %v551 = vld [vmem:[%s284 + $0x8] sm:$0xff]
        %v552 = vld [vmem:[%s284 + $0x10] sm:$0xff]
        %v553 = vld [vmem:[%s284 + $0x18] sm:$0xff]
        %v554 = vld [vmem:[%s284 + $0x20] sm:$0xff]
        %v555 = vld [vmem:[%s284 + $0x28] sm:$0xff]
        %v556 = vld [vmem:[%s284 + $0x30] sm:$0xff]
        %v557 = vld [vmem:[%s284 + $0x38] sm:$0xff]
        %v558 = vld [vmem:[%s284 + $0x40] sm:$0xff]
        %v559 = vld [vmem:[%s284 + $0x48] sm:$0xff]
        %v560 = vld [vmem:[%s284 + $0x50] sm:$0xff]
        %v561 = vld [vmem:[%s284 + $0x58] sm:$0xff]
        %v562 = vld [vmem:[%s284 + $0x60] sm:$0xff]
        %v563 = vld [vmem:[%s284 + $0x68] sm:$0xff]
        %v564 = vld [vmem:[%s284 + $0x70] sm:$0xff]
        %v565 = vld [vmem:[%s284 + $0x78] sm:$0xff]
        %v566 = vmul.f32 %v472, %v550
        %v567 = vmul.f32 %v477, %v551
        %v568 = vmul.f32 %v482, %v552
        %v569 = vmul.f32 %v487, %v553
        %v570 = vmul.f32 %v492, %v554
        %v571 = vmul.f32 %v497, %v555
        %v572 = vmul.f32 %v502, %v556
        %v573 = vmul.f32 %v507, %v557
        %v574 = vmul.f32 %v512, %v558
        %v575 = vmul.f32 %v517, %v559
        %v576 = vmul.f32 %v522, %v560
        %v577 = vmul.f32 %v527, %v561
        %v578 = vmul.f32 %v532, %v562
        %v579 = vmul.f32 %v537, %v563
        %v580 = vmul.f32 %v542, %v564
        %v581 = vmul.f32 %v547, %v565
        %v582 = vsel %vm356, %v566, 0.0
        %583 = vadd.xlane.f32.xlu0 %v582
        %v584 = vpop.xlane.xlu0 %583
        %v585 = vsel %vm356, %v567, 0.0
        %586 = vadd.xlane.f32.xlu0 %v585
        %v587 = vpop.xlane.xlu0 %586
        %v588 = vsel %vm356, %v568, 0.0
        %589 = vadd.xlane.f32.xlu0 %v588
        %v590 = vpop.xlane.xlu0 %589
        %v591 = vsel %vm356, %v569, 0.0
        %592 = vadd.xlane.f32.xlu0 %v591
        %v593 = vpop.xlane.xlu0 %592
        %v594 = vsel %vm356, %v570, 0.0
        %595 = vadd.xlane.f32.xlu0 %v594
        %v596 = vpop.xlane.xlu0 %595
        %v597 = vsel %vm356, %v571, 0.0
        %598 = vadd.xlane.f32.xlu0 %v597
        %v599 = vpop.xlane.xlu0 %598
        %v600 = vsel %vm356, %v572, 0.0
        %601 = vadd.xlane.f32.xlu0 %v600
        %v602 = vpop.xlane.xlu0 %601
        %v603 = vsel %vm356, %v573, 0.0
        %604 = vadd.xlane.f32.xlu0 %v603
        %v605 = vpop.xlane.xlu0 %604
        %v606 = vsel %vm356, %v574, 0.0
        %607 = vadd.xlane.f32.xlu0 %v606
        %v608 = vpop.xlane.xlu0 %607
        %v609 = vsel %vm356, %v575, 0.0
        %610 = vadd.xlane.f32.xlu0 %v609
        %v611 = vpop.xlane.xlu0 %610
        %v612 = vsel %vm356, %v576, 0.0
        %613 = vadd.xlane.f32.xlu0 %v612
        %v614 = vpop.xlane.xlu0 %613
        %v615 = vsel %vm356, %v577, 0.0
        %616 = vadd.xlane.f32.xlu0 %v615
        %v617 = vpop.xlane.xlu0 %616
        %v618 = vsel %vm356, %v578, 0.0
        %619 = vadd.xlane.f32.xlu0 %v618
        %v620 = vpop.xlane.xlu0 %619
        %v621 = vsel %vm356, %v579, 0.0
        %622 = vadd.xlane.f32.xlu0 %v621
        %v623 = vpop.xlane.xlu0 %622
        %v624 = vsel %vm356, %v580, 0.0
        %625 = vadd.xlane.f32.xlu0 %v624
        %v626 = vpop.xlane.xlu0 %625
        %v627 = vsel %vm356, %v581, 0.0
        %628 = vadd.xlane.f32.xlu0 %v627
        %v629 = vpop.xlane.xlu0 %628
        %v630 = vld [vmem:[%s293] sm:$0x3]
        %v632 = vrot.slane %v630, 1
        %vm650 = vcmask 1040384
        %v651 = vrot.slane %v550, 7
        %v652 = vrot.slane %v551, 7
        %v653 = vsel %vm650, %v651, %v652
        %v654 = vrot.slane %v552, 7
        %v655 = vsel %vm650, %v652, %v654
        %v656 = vrot.slane %v553, 7
        %v657 = vsel %vm650, %v654, %v656
        %v658 = vrot.slane %v554, 7
        %v659 = vsel %vm650, %v656, %v658
        %v660 = vrot.slane %v555, 7
        %v661 = vsel %vm650, %v658, %v660
        %v662 = vrot.slane %v556, 7
        %v663 = vsel %vm650, %v660, %v662
        %v664 = vrot.slane %v557, 7
        %v665 = vsel %vm650, %v662, %v664
        %v666 = vrot.slane %v558, 7
        %v667 = vsel %vm650, %v664, %v666
        %v668 = vrot.slane %v559, 7
        %v669 = vsel %vm650, %v666, %v668
        %v670 = vrot.slane %v560, 7
        %v671 = vsel %vm650, %v668, %v670
        %v672 = vrot.slane %v561, 7
        %v673 = vsel %vm650, %v670, %v672
        %v674 = vrot.slane %v562, 7
        %v675 = vsel %vm650, %v672, %v674
        %v676 = vrot.slane %v563, 7
        %v677 = vsel %vm650, %v674, %v676
        %v678 = vrot.slane %v564, 7
        %v679 = vsel %vm650, %v676, %v678
        %v680 = vrot.slane %v565, 7
        %v681 = vsel %vm650, %v678, %v680
        %v698 = vsel %vm650, %v632, %v651
        %v699 = vmul.f32 %v472, %v698
        %v700 = vmul.f32 %v477, %v653
        %v701 = vmul.f32 %v482, %v655
        %v702 = vmul.f32 %v487, %v657
        %v703 = vmul.f32 %v492, %v659
        %v704 = vmul.f32 %v497, %v661
        %v705 = vmul.f32 %v502, %v663
        %v706 = vmul.f32 %v507, %v665
        %v707 = vmul.f32 %v512, %v667
        %v708 = vmul.f32 %v517, %v669
        %v709 = vmul.f32 %v522, %v671
        %v710 = vmul.f32 %v527, %v673
        %v711 = vmul.f32 %v532, %v675
        %v712 = vmul.f32 %v537, %v677
        %v713 = vmul.f32 %v542, %v679
        %v714 = vmul.f32 %v547, %v681
        %v715 = vsel %vm356, %v699, 0.0
        %716 = vadd.xlane.f32.xlu0 %v715
        %v717 = vpop.xlane.xlu0 %716
        %v718 = vsel %vm356, %v700, 0.0
        %719 = vadd.xlane.f32.xlu0 %v718
        %v720 = vpop.xlane.xlu0 %719
        %v721 = vsel %vm356, %v701, 0.0
        %722 = vadd.xlane.f32.xlu0 %v721
        %v723 = vpop.xlane.xlu0 %722
        %v724 = vsel %vm356, %v702, 0.0
        %725 = vadd.xlane.f32.xlu0 %v724
        %v726 = vpop.xlane.xlu0 %725
        %v727 = vsel %vm356, %v703, 0.0
        %728 = vadd.xlane.f32.xlu0 %v727
        %v729 = vpop.xlane.xlu0 %728
        %v730 = vsel %vm356, %v704, 0.0
        %731 = vadd.xlane.f32.xlu0 %v730
        %v732 = vpop.xlane.xlu0 %731
        %v733 = vsel %vm356, %v705, 0.0
        %734 = vadd.xlane.f32.xlu0 %v733
        %v735 = vpop.xlane.xlu0 %734
        %v736 = vsel %vm356, %v706, 0.0
        %737 = vadd.xlane.f32.xlu0 %v736
        %v738 = vpop.xlane.xlu0 %737
        %v739 = vsel %vm356, %v707, 0.0
        %740 = vadd.xlane.f32.xlu0 %v739
        %v741 = vpop.xlane.xlu0 %740
        %v742 = vsel %vm356, %v708, 0.0
        %743 = vadd.xlane.f32.xlu0 %v742
        %v744 = vpop.xlane.xlu0 %743
        %v745 = vsel %vm356, %v709, 0.0
        %746 = vadd.xlane.f32.xlu0 %v745
        %v747 = vpop.xlane.xlu0 %746
        %v748 = vsel %vm356, %v710, 0.0
        %749 = vadd.xlane.f32.xlu0 %v748
        %v750 = vpop.xlane.xlu0 %749
        %v751 = vsel %vm356, %v711, 0.0
        %752 = vadd.xlane.f32.xlu0 %v751
        %v753 = vpop.xlane.xlu0 %752
        %v754 = vsel %vm356, %v712, 0.0
        %755 = vadd.xlane.f32.xlu0 %v754
        %v756 = vpop.xlane.xlu0 %755
        %v757 = vsel %vm356, %v713, 0.0
        %758 = vadd.xlane.f32.xlu0 %v757
        %v759 = vpop.xlane.xlu0 %758
        %v760 = vsel %vm356, %v714, 0.0
        %761 = vadd.xlane.f32.xlu0 %v760
        %v762 = vpop.xlane.xlu0 %761
        %vm763 = vcmask 1041408
        %v764 = vrot.slane %v550, 6
        %v765 = vrot.slane %v551, 6
        %v766 = vsel %vm763, %v764, %v765
        %v767 = vrot.slane %v552, 6
        %v768 = vsel %vm763, %v765, %v767
        %v769 = vrot.slane %v553, 6
        %v770 = vsel %vm763, %v767, %v769
        %v771 = vrot.slane %v554, 6
        %v772 = vsel %vm763, %v769, %v771
        %v773 = vrot.slane %v555, 6
        %v774 = vsel %vm763, %v771, %v773
        %v775 = vrot.slane %v556, 6
        %v776 = vsel %vm763, %v773, %v775
        %v777 = vrot.slane %v557, 6
        %v778 = vsel %vm763, %v775, %v777
        %v779 = vrot.slane %v558, 6
        %v780 = vsel %vm763, %v777, %v779
        %v781 = vrot.slane %v559, 6
        %v782 = vsel %vm763, %v779, %v781
        %v783 = vrot.slane %v560, 6
        %v784 = vsel %vm763, %v781, %v783
        %v785 = vrot.slane %v561, 6
        %v786 = vsel %vm763, %v783, %v785
        %v787 = vrot.slane %v562, 6
        %v788 = vsel %vm763, %v785, %v787
        %v789 = vrot.slane %v563, 6
        %v790 = vsel %vm763, %v787, %v789
        %v791 = vrot.slane %v564, 6
        %v792 = vsel %vm763, %v789, %v791
        %v793 = vrot.slane %v565, 6
        %v794 = vsel %vm763, %v791, %v793
        %v811 = vsel %vm763, %v630, %v764
        %v812 = vmul.f32 %v472, %v811
        %v813 = vmul.f32 %v477, %v766
        %v814 = vmul.f32 %v482, %v768
        %v815 = vmul.f32 %v487, %v770
        %v816 = vmul.f32 %v492, %v772
        %v817 = vmul.f32 %v497, %v774
        %v818 = vmul.f32 %v502, %v776
        %v819 = vmul.f32 %v507, %v778
        %v820 = vmul.f32 %v512, %v780
        %v821 = vmul.f32 %v517, %v782
        %v822 = vmul.f32 %v522, %v784
        %v823 = vmul.f32 %v527, %v786
        %v824 = vmul.f32 %v532, %v788
        %v825 = vmul.f32 %v537, %v790
        %v826 = vmul.f32 %v542, %v792
        %v827 = vmul.f32 %v547, %v794
        %v828 = vsel %vm356, %v812, 0.0
        %829 = vadd.xlane.f32.xlu0 %v828
        %v830 = vpop.xlane.xlu0 %829
        %v831 = vsel %vm356, %v813, 0.0
        %832 = vadd.xlane.f32.xlu0 %v831
        %v833 = vpop.xlane.xlu0 %832
        %v834 = vsel %vm356, %v814, 0.0
        %835 = vadd.xlane.f32.xlu0 %v834
        %v836 = vpop.xlane.xlu0 %835
        %v837 = vsel %vm356, %v815, 0.0
        %838 = vadd.xlane.f32.xlu0 %v837
        %v839 = vpop.xlane.xlu0 %838
        %v840 = vsel %vm356, %v816, 0.0
        %841 = vadd.xlane.f32.xlu0 %v840
        %v842 = vpop.xlane.xlu0 %841
        %v843 = vsel %vm356, %v817, 0.0
        %844 = vadd.xlane.f32.xlu0 %v843
        %v845 = vpop.xlane.xlu0 %844
        %v846 = vsel %vm356, %v818, 0.0
        %847 = vadd.xlane.f32.xlu0 %v846
        %v848 = vpop.xlane.xlu0 %847
        %v849 = vsel %vm356, %v819, 0.0
        %850 = vadd.xlane.f32.xlu0 %v849
        %v851 = vpop.xlane.xlu0 %850
        %v852 = vsel %vm356, %v820, 0.0
        %853 = vadd.xlane.f32.xlu0 %v852
        %v854 = vpop.xlane.xlu0 %853
        %v855 = vsel %vm356, %v821, 0.0
        %856 = vadd.xlane.f32.xlu0 %v855
        %v857 = vpop.xlane.xlu0 %856
        %v858 = vsel %vm356, %v822, 0.0
        %859 = vadd.xlane.f32.xlu0 %v858
        %v860 = vpop.xlane.xlu0 %859
        %v861 = vsel %vm356, %v823, 0.0
        %862 = vadd.xlane.f32.xlu0 %v861
        %v863 = vpop.xlane.xlu0 %862
        %v864 = vsel %vm356, %v824, 0.0
        %865 = vadd.xlane.f32.xlu0 %v864
        %v866 = vpop.xlane.xlu0 %865
        %v867 = vsel %vm356, %v825, 0.0
        %868 = vadd.xlane.f32.xlu0 %v867
        %v869 = vpop.xlane.xlu0 %868
        %v870 = vsel %vm356, %v826, 0.0
        %871 = vadd.xlane.f32.xlu0 %v870
        %v872 = vpop.xlane.xlu0 %871
        %v873 = vsel %vm356, %v827, 0.0
        %874 = vadd.xlane.f32.xlu0 %v873
        %v875 = vpop.xlane.xlu0 %874
        %v892 = vlaneseq
        %v893 = vand.u32 %v892, 127
        %v894 = vlaneseq
        %v895 = vshrl.u32 %v894, 7
        %v896 = vsub.s32 %v893, %v895
        %v897 = vrot.slane %v584, %v896
        %v898 = vadd.s32 %v893, 4294967288
        %v899 = vlaneseq
        %v900 = vshrl.u32 %v899, 7
        %v901 = vsub.s32 %v898, %v900
        %v902 = vrot.slane %v587, %v901
        %vm903 = vcmask 130112
        %v904 = vsel %vm903, %v902, %v897
        %v905 = vadd.s32 %v893, 4294967280
        %v906 = vlaneseq
        %v907 = vshrl.u32 %v906, 7
        %v908 = vsub.s32 %v905, %v907
        %v909 = vrot.slane %v590, %v908
        %vm910 = vcmask 195712
        %v911 = vsel %vm910, %v909, %v904
        %v912 = vadd.s32 %v893, 4294967272
        %v913 = vlaneseq
        %v914 = vshrl.u32 %v913, 7
        %v915 = vsub.s32 %v912, %v914
        %v916 = vrot.slane %v593, %v915
        %vm917 = vcmask 261312
        %v918 = vsel %vm917, %v916, %v911
        %v919 = vadd.s32 %v893, 4294967264
        %v920 = vlaneseq
        %v921 = vshrl.u32 %v920, 7
        %v922 = vsub.s32 %v919, %v921
        %v923 = vrot.slane %v596, %v922
        %vm924 = vcmask 326912
        %v925 = vsel %vm924, %v923, %v918
        %v926 = vadd.s32 %v893, 4294967256
        %v927 = vlaneseq
        %v928 = vshrl.u32 %v927, 7
        %v929 = vsub.s32 %v926, %v928
        %v930 = vrot.slane %v599, %v929
        %vm931 = vcmask 392512
        %v932 = vsel %vm931, %v930, %v925
        %v933 = vadd.s32 %v893, 4294967248
        %v934 = vlaneseq
        %v935 = vshrl.u32 %v934, 7
        %v936 = vsub.s32 %v933, %v935
        %v937 = vrot.slane %v602, %v936
        %vm938 = vcmask 458112
        %v939 = vsel %vm938, %v937, %v932
        %v940 = vadd.s32 %v893, 4294967240
        %v941 = vlaneseq
        %v942 = vshrl.u32 %v941, 7
        %v943 = vsub.s32 %v940, %v942
        %v944 = vrot.slane %v605, %v943
        %vm945 = vcmask 523712
        %v946 = vsel %vm945, %v944, %v939
        %v947 = vadd.s32 %v893, 4294967232
        %v948 = vlaneseq
        %v949 = vshrl.u32 %v948, 7
        %v950 = vsub.s32 %v947, %v949
        %v951 = vrot.slane %v608, %v950
        %vm952 = vcmask 589312
        %v953 = vsel %vm952, %v951, %v946
        %v954 = vadd.s32 %v893, 4294967224
        %v955 = vlaneseq
        %v956 = vshrl.u32 %v955, 7
        %v957 = vsub.s32 %v954, %v956
        %v958 = vrot.slane %v611, %v957
        %vm959 = vcmask 654912
        %v960 = vsel %vm959, %v958, %v953
        %v961 = vadd.s32 %v893, 4294967216
        %v962 = vlaneseq
        %v963 = vshrl.u32 %v962, 7
        %v964 = vsub.s32 %v961, %v963
        %v965 = vrot.slane %v614, %v964
        %vm966 = vcmask 720512
        %v967 = vsel %vm966, %v965, %v960
        %v968 = vadd.s32 %v893, 4294967208
        %v969 = vlaneseq
        %v970 = vshrl.u32 %v969, 7
        %v971 = vsub.s32 %v968, %v970
        %v972 = vrot.slane %v617, %v971
        %vm973 = vcmask 786112
        %v974 = vsel %vm973, %v972, %v967
        %v975 = vadd.s32 %v893, 4294967200
        %v976 = vlaneseq
        %v977 = vshrl.u32 %v976, 7
        %v978 = vsub.s32 %v975, %v977
        %v979 = vrot.slane %v620, %v978
        %vm980 = vcmask 851712
        %v981 = vsel %vm980, %v979, %v974
        %v982 = vadd.s32 %v893, 4294967192
        %v983 = vlaneseq
        %v984 = vshrl.u32 %v983, 7
        %v985 = vsub.s32 %v982, %v984
        %v986 = vrot.slane %v623, %v985
        %vm987 = vcmask 917312
        %v988 = vsel %vm987, %v986, %v981
        %v989 = vadd.s32 %v893, 4294967184
        %v990 = vlaneseq
        %v991 = vshrl.u32 %v990, 7
        %v992 = vsub.s32 %v989, %v991
        %v993 = vrot.slane %v626, %v992
        %vm994 = vcmask 982912
        %v995 = vsel %vm994, %v993, %v988
        %v996 = vadd.s32 %v893, 4294967176
        %v997 = vlaneseq
        %v998 = vshrl.u32 %v997, 7
        %v999 = vsub.s32 %v996, %v998
        %v1000 = vrot.slane %v629, %v999
        %vm1001 = vcmask 1048512
        %v1002 = vsel %vm1001, %v1000, %v995
        %v1020 = vlaneseq
        %v1021 = vshrl.u32 %v1020, 7
        %v1022 = vsub.s32 %v893, %v1021
        %v1023 = vrot.slane %v717, %v1022
        %v1024 = vlaneseq
        %v1025 = vshrl.u32 %v1024, 7
        %v1026 = vsub.s32 %v898, %v1025
        %v1027 = vrot.slane %v720, %v1026
        %v1028 = vsel %vm903, %v1027, %v1023
        %v1029 = vlaneseq
        %v1030 = vshrl.u32 %v1029, 7
        %v1031 = vsub.s32 %v905, %v1030
        %v1032 = vrot.slane %v723, %v1031
        %v1033 = vsel %vm910, %v1032, %v1028
        %v1034 = vlaneseq
        %v1035 = vshrl.u32 %v1034, 7
        %v1036 = vsub.s32 %v912, %v1035
        %v1037 = vrot.slane %v726, %v1036
        %v1038 = vsel %vm917, %v1037, %v1033
        %v1039 = vlaneseq
        %v1040 = vshrl.u32 %v1039, 7
        %v1041 = vsub.s32 %v919, %v1040
        %v1042 = vrot.slane %v729, %v1041
        %v1043 = vsel %vm924, %v1042, %v1038
        %v1044 = vlaneseq
        %v1045 = vshrl.u32 %v1044, 7
        %v1046 = vsub.s32 %v926, %v1045
        %v1047 = vrot.slane %v732, %v1046
        %v1048 = vsel %vm931, %v1047, %v1043
        %v1049 = vlaneseq
        %v1050 = vshrl.u32 %v1049, 7
        %v1051 = vsub.s32 %v933, %v1050
        %v1052 = vrot.slane %v735, %v1051
        %v1053 = vsel %vm938, %v1052, %v1048
        %v1054 = vlaneseq
        %v1055 = vshrl.u32 %v1054, 7
        %v1056 = vsub.s32 %v940, %v1055
        %v1057 = vrot.slane %v738, %v1056
        %v1058 = vsel %vm945, %v1057, %v1053
        %v1059 = vlaneseq
        %v1060 = vshrl.u32 %v1059, 7
        %v1061 = vsub.s32 %v947, %v1060
        %v1062 = vrot.slane %v741, %v1061
        %v1063 = vsel %vm952, %v1062, %v1058
        %v1064 = vlaneseq
        %v1065 = vshrl.u32 %v1064, 7
        %v1066 = vsub.s32 %v954, %v1065
        %v1067 = vrot.slane %v744, %v1066
        %v1068 = vsel %vm959, %v1067, %v1063
        %v1069 = vlaneseq
        %v1070 = vshrl.u32 %v1069, 7
        %v1071 = vsub.s32 %v961, %v1070
        %v1072 = vrot.slane %v747, %v1071
        %v1073 = vsel %vm966, %v1072, %v1068
        %v1074 = vlaneseq
        %v1075 = vshrl.u32 %v1074, 7
        %v1076 = vsub.s32 %v968, %v1075
        %v1077 = vrot.slane %v750, %v1076
        %v1078 = vsel %vm973, %v1077, %v1073
        %v1079 = vlaneseq
        %v1080 = vshrl.u32 %v1079, 7
        %v1081 = vsub.s32 %v975, %v1080
        %v1082 = vrot.slane %v753, %v1081
        %v1083 = vsel %vm980, %v1082, %v1078
        %v1084 = vlaneseq
        %v1085 = vshrl.u32 %v1084, 7
        %v1086 = vsub.s32 %v982, %v1085
        %v1087 = vrot.slane %v756, %v1086
        %v1088 = vsel %vm987, %v1087, %v1083
        %v1089 = vlaneseq
        %v1090 = vshrl.u32 %v1089, 7
        %v1091 = vsub.s32 %v989, %v1090
        %v1092 = vrot.slane %v759, %v1091
        %v1093 = vsel %vm994, %v1092, %v1088
        %v1094 = vlaneseq
        %v1095 = vshrl.u32 %v1094, 7
        %v1096 = vsub.s32 %v996, %v1095
        %v1097 = vrot.slane %v762, %v1096
        %v1098 = vsel %vm1001, %v1097, %v1093
        %v1116 = vlaneseq
        %v1117 = vshrl.u32 %v1116, 7
        %v1118 = vsub.s32 %v893, %v1117
        %v1119 = vrot.slane %v830, %v1118
        %v1120 = vlaneseq
        %v1121 = vshrl.u32 %v1120, 7
        %v1122 = vsub.s32 %v898, %v1121
        %v1123 = vrot.slane %v833, %v1122
        %v1124 = vsel %vm903, %v1123, %v1119
        %v1125 = vlaneseq
        %v1126 = vshrl.u32 %v1125, 7
        %v1127 = vsub.s32 %v905, %v1126
        %v1128 = vrot.slane %v836, %v1127
        %v1129 = vsel %vm910, %v1128, %v1124
        %v1130 = vlaneseq
        %v1131 = vshrl.u32 %v1130, 7
        %v1132 = vsub.s32 %v912, %v1131
        %v1133 = vrot.slane %v839, %v1132
        %v1134 = vsel %vm917, %v1133, %v1129
        %v1135 = vlaneseq
        %v1136 = vshrl.u32 %v1135, 7
        %v1137 = vsub.s32 %v919, %v1136
        %v1138 = vrot.slane %v842, %v1137
        %v1139 = vsel %vm924, %v1138, %v1134
        %v1140 = vlaneseq
        %v1141 = vshrl.u32 %v1140, 7
        %v1142 = vsub.s32 %v926, %v1141
        %v1143 = vrot.slane %v845, %v1142
        %v1144 = vsel %vm931, %v1143, %v1139
        %v1145 = vlaneseq
        %v1146 = vshrl.u32 %v1145, 7
        %v1147 = vsub.s32 %v933, %v1146
        %v1148 = vrot.slane %v848, %v1147
        %v1149 = vsel %vm938, %v1148, %v1144
        %v1150 = vlaneseq
        %v1151 = vshrl.u32 %v1150, 7
        %v1152 = vsub.s32 %v940, %v1151
        %v1153 = vrot.slane %v851, %v1152
        %v1154 = vsel %vm945, %v1153, %v1149
        %v1155 = vlaneseq
        %v1156 = vshrl.u32 %v1155, 7
        %v1157 = vsub.s32 %v947, %v1156
        %v1158 = vrot.slane %v854, %v1157
        %v1159 = vsel %vm952, %v1158, %v1154
        %v1160 = vlaneseq
        %v1161 = vshrl.u32 %v1160, 7
        %v1162 = vsub.s32 %v954, %v1161
        %v1163 = vrot.slane %v857, %v1162
        %v1164 = vsel %vm959, %v1163, %v1159
        %v1165 = vlaneseq
        %v1166 = vshrl.u32 %v1165, 7
        %v1167 = vsub.s32 %v961, %v1166
        %v1168 = vrot.slane %v860, %v1167
        %v1169 = vsel %vm966, %v1168, %v1164
        %v1170 = vlaneseq
        %v1171 = vshrl.u32 %v1170, 7
        %v1172 = vsub.s32 %v968, %v1171
        %v1173 = vrot.slane %v863, %v1172
        %v1174 = vsel %vm973, %v1173, %v1169
        %v1175 = vlaneseq
        %v1176 = vshrl.u32 %v1175, 7
        %v1177 = vsub.s32 %v975, %v1176
        %v1178 = vrot.slane %v866, %v1177
        %v1179 = vsel %vm980, %v1178, %v1174
        %v1180 = vlaneseq
        %v1181 = vshrl.u32 %v1180, 7
        %v1182 = vsub.s32 %v982, %v1181
        %v1183 = vrot.slane %v869, %v1182
        %v1184 = vsel %vm987, %v1183, %v1179
        %v1185 = vlaneseq
        %v1186 = vshrl.u32 %v1185, 7
        %v1187 = vsub.s32 %v989, %v1186
        %v1188 = vrot.slane %v872, %v1187
        %v1189 = vsel %vm994, %v1188, %v1184
        %v1190 = vlaneseq
        %v1191 = vshrl.u32 %v1190, 7
        %v1192 = vsub.s32 %v996, %v1191
        %v1193 = vrot.slane %v875, %v1192
        %v1194 = vsel %vm1001, %v1193, %v1189
        %v1196 = vsel %vm650, %v1002, %v1098
        %v1197 = vsel %vm763, %v1196, %v1194
        %s1198 = sld [smem:[#allocation2]]
        %v1199 = vstv %s1198
        %v1200 = vadd.f32 %v1197, %v1199
        %1201 = vst [vmem:[%s329] sm:$0x7] %v1200
        %s1202 = sand.u32 %s152, 1
        %s1203 = scalar_lea.sflag [#allocation5], %s1202
        %s1204 = sand.u32 %s152, 1
        %s1205 = smul.addr %s1204, 4
        %s1206 = scalar_lea.vmem [#allocation10], %s1205
        // Predicated region
        $region57: #{discriminator_forward.1} parent=39 // pred_check
          %p1207 = pneg %p162
        $region58: #{discriminator_forward.1} parent=39 // pred_check_branch
          %1209 = sbr.rel (%p1207) target = $region60
        $region59: #{discriminator_forward.1} parent=39 // pred_region
          %s1211 = ssub.s32 64, 64
          %1212 = vsyncadd %s1203, %s1211
          %s1213 = smul.addr %s24, 64
          %s1214 = scalar_lea.hbm %s5, %s1213
          %s1216 = sshll.u32 %s1206, 4
          %s1217 = int_to_ptr.vmem [resolvable:$true] %s1216
          %1219 = dma.vmem_to_hbm [thread:$0]  %s1217, 64, %s1214, %s1203
        $region60: #{discriminator_forward.1} parent=39 // pred_fallthru
          _
      $region40: #{discriminator_forward.1} parent=5 // pred_fallthru
        _
      %p1220 = scmp.le.s32.totalorder 2, %s19
      // Predicated region
      $region61: #{discriminator_forward.1} parent=5 // pred_check
        %p1221 = pneg %p1220
      $region62: #{discriminator_forward.1} parent=5 // pred_check_branch
        %1223 = sbr.rel (%p1221) target = $region64
      $region63: #{discriminator_forward.1} parent=5 // pred_region
        %s1224 = ssub.s32 %s19, 2
        // Predicated region
        $region65: #{discriminator_forward.1} parent=63 // pred_check
          %p1225 = pneg %p168
        $region66: #{discriminator_forward.1} parent=63 // pred_check_branch
          %1227 = sbr.rel (%p1225) target = $region68
        $region67: #{discriminator_forward.1} parent=63 // pred_region
          %s1228 = sand.u32 %s153, 1
          %s1229 = scalar_lea.sflag [#allocation5], %s1228
          %s1230 = sand.u32 %s153, 1
          %s1231 = smul.addr %s1230, 4
          %s1232 = scalar_lea.vmem [#allocation10], %s1231
          %1233 = dma.done %s1229, 64
        $region68: #{discriminator_forward.1} parent=63 // pred_fallthru
          _
      $region64: #{discriminator_forward.1} parent=5 // pred_fallthru
        _
    $region6: #{discriminator_forward.1} parent=1 // loop_footer
      %s23 = sadd.s32 1, %s19
    $region7: #{discriminator_forward.1} parent=1 // loop_footer_branch
      %18 = sbr.rel target = $region3
    $region8: #{discriminator_forward.1} parent=1 // loop_exit
      _
    %1234 = vsyncpa [#allocation4], 1
    %s1235 = scalar_lea.sflag [#allocation4], 1
    %1236 = vsyncpa %s1235, 1
    %1237 = vsyncpa [#allocation7], 1
    %1238 = vsyncpa [#allocation5], 1
    %s1239 = scalar_lea.sflag [#allocation5], 1
    %1240 = vsyncpa %s1239, 1

</llo_original>
